<compile_context>
chip_gen: v7x
topology: tpu7x:2x2x1
jax: 0.10.0
libtpu: 0.0.40
codegen_flags: <defaults>
</compile_context>

<pallas_src>
import functools

import jax
import jax.numpy as jnp
from jax.experimental import pallas as pl
from jax.experimental.pallas import tpu as pltpu

F32 = jnp.float32
BF16 = jnp.bfloat16
NEG_INF = -9e15  # matches zero_vec in HyperGraphAttentionLayerSparse


# ----------------------------------------------------------------------------
# small in-kernel helpers
# ----------------------------------------------------------------------------
def _softmax_lastdim(e):
    e = e - jnp.max(e, axis=-1, keepdims=True)
    p = jnp.exp(e)
    denom = jnp.sum(p, axis=-1, keepdims=True)
    return p * pl.reciprocal(denom, approx=True)      # EUP slot, VALU stays free


def _leaky_relu(x, alpha):
    return jnp.where(x > 0, x, alpha * x)


def _elu(x):
    # clamp arg of exp so the unselected branch never overflows
    return jnp.where(x > 0, x, jnp.exp(jnp.minimum(x, 0.0)) - 1.0)


def _vgae_adjacency(x, adj, w1, wmu):
    """VGAE (eval): mu = adj @ ((relu(adj @ (x@W1))) @ W_mu); A = sigmoid(mu mu^T)."""
    sup1 = jnp.dot(x, w1, preferred_element_type=F32)
    h1 = jnp.maximum(jnp.dot(adj, sup1.astype(BF16), preferred_element_type=F32), 0.0)
    sup2 = jnp.dot(h1.astype(BF16), wmu, preferred_element_type=F32)
    mu = jnp.dot(adj, sup2.astype(BF16), preferred_element_type=F32)
    mu_b = mu.astype(BF16)
    # mu @ mu^T done in-kernel by contracting the last dims (no HBM transpose)
    gram = jax.lax.dot_general(mu_b, mu_b, (((1,), (1,)), ((), ())),
                               preferred_element_type=F32)
    return jax.nn.sigmoid(gram)                        # (N, N), f32, symmetric


# ----------------------------------------------------------------------------
# Kernel 1: layer 0  ==  VGAE + GraphConvolution, fused per batch element
# ----------------------------------------------------------------------------
def _layer0_kernel(x_ref, adj_ref, w1_ref, wmu_ref, wg_ref, bg_ref, o_ref):
    x = x_ref[...]                                     # (N, H)  bf16
    adj = adj_ref[...]                                 # (N, N)  bf16
    a_hid = _vgae_adjacency(x, adj, w1_ref[...], wmu_ref[...]).astype(BF16)
    # GraphConvolution: A_hid @ (x @ Wg) + bg   (A_hid never leaves VMEM)
    sup_g = jnp.dot(x, wg_ref[...], preferred_element_type=F32)
    g = jnp.dot(a_hid, sup_g.astype(BF16), preferred_element_type=F32) + bg_ref[...]
    o_ref[...] = g.astype(o_ref.dtype)


def layer0_forward(x, adj, vae_p, gc_p, hid):
    B, N, H = x.shape
    return pl.pallas_call(
        _layer0_kernel,
        out_shape=jax.ShapeDtypeStruct((B, N, hid), BF16),
        grid=(B,),
        in_specs=[
            pl.BlockSpec((None, N, H), lambda b: (b, 0, 0)),
            pl.BlockSpec((None, N, N), lambda b: (b, 0, 0)),
            pl.BlockSpec((H, hid), lambda b: (0, 0)),
            pl.BlockSpec((hid, hid), lambda b: (0, 0)),
            pl.BlockSpec((H, hid), lambda b: (0, 0)),
            pl.BlockSpec((1, hid), lambda b: (0, 0)),
        ],
        out_specs=pl.BlockSpec((None, N, hid), lambda b: (b, 0, 0)),
        compiler_params=pltpu.CompilerParams(dimension_semantics=("parallel",)),
    )(x.astype(BF16), adj.astype(BF16),
      vae_p["W1"].astype(BF16), vae_p["W_mu"].astype(BF16),
      gc_p["W"].astype(BF16), gc_p["b"].reshape(1, hid).astype(F32))


# ----------------------------------------------------------------------------
# Kernel 2: layer k>=1  ==  VGAE + HyperGraphAttention (both passes), fused
# ----------------------------------------------------------------------------
def _layerk_kernel(x_ref, adj_ref, w1_ref, wmu_ref, wp_ref, bt_ref, w3_ref,
                   ax_ref, a2x_ref, a2e_ref, const_ref, o_ref, *, hid, alpha):
    x = x_ref[...]                                     # (N, hid) bf16
    adj = adj_ref[...]                                 # (N, N)   bf16
    n = adj.shape[0]

    # --- VGAE -> A_hid, kept resident in VMEM
    a_hid = _vgae_adjacency(x, adj, w1_ref[...], wmu_ref[...])
    mask = a_hid > 0.0
    # A_hid = sigmoid(mu mu^T) is symmetric, so adj^T == adj (no in-kernel transpose)
    mask_t = mask

    # --- fused projections: [x_4att | x_t] = x @ [weight2 | W]
    proj = jnp.dot(x, wp_ref[...], preferred_element_type=F32)     # (N, 2*hid) f32
    x_4att = proj[:, :hid]
    x_t = proj[:, hid:] + bt_ref[...]                              # transfer + bias

    # --- node -> edge attention:
    #     e1[i, j] = leakyrelu(wc . a[:hid]  +  x_4att[j] . a[hid:])
    cc_row = jax.lax.dot_general(ax_ref[...], x_4att.astype(BF16),
                                 (((1,), (1,)), ((), ())),
                                 preferred_element_type=F32)       # (1, N)
    e1 = _leaky_relu(const_ref[...] + cc_row, alpha)               # (1, N)
    e1 = jnp.broadcast_to(e1, (n, n))
    e1 = jnp.where(mask, e1, NEG_INF)
    attn_edge = _softmax_lastdim(e1)
    edge = jnp.dot(attn_edge.astype(BF16), x_t.astype(BF16),
                   preferred_element_type=F32)                     # (N, hid)

    # --- edge -> node attention:
    #     e2[j, i] = leakyrelu(x_4att[j] . a2[:hid]  +  edge_4att[i] . a2[hid:])
    edge_4att = jnp.dot(edge.astype(BF16), w3_ref[...],
                        preferred_element_type=F32)
    rc_col = jnp.dot(x_4att.astype(BF16), a2x_ref[...],
                     preferred_element_type=F32)                   # (N, 1)
    cc2_row = jax.lax.dot_general(a2e_ref[...], edge_4att.astype(BF16),
                                  (((1,), (1,)), ((), ())),
                                  preferred_element_type=F32)      # (1, N)
    e2 = _leaky_relu(rc_col + cc2_row, alpha)                      # (N, N)
    e2 = jnp.where(mask_t, e2, NEG_INF)
    attn_node = _softmax_lastdim(e2)
    node = jnp.dot(attn_node.astype(BF16), edge.astype(BF16),
                   preferred_element_type=F32)
    o_ref[...] = _elu(node).astype(o_ref.dtype)                    # concat=True -> ELU


def hgat_layer_forward(x, adj, vae_p, hg_p, hid, alpha=0.1):
    B, N, _ = x.shape
    wp = jnp.concatenate([hg_p["weight2"], hg_p["W"]], axis=1)     # (hid, 2*hid)
    a_q = hg_p["a"][:hid, 0]
    a_x_row = hg_p["a"][hid:, :].reshape(1, hid)
    a2_x_col = hg_p["a2"][:hid, :]                                 # (hid, 1)
    a2_e_row = hg_p["a2"][hid:, :].reshape(1, hid)
    const = jnp.dot(hg_p["wc"], a_q).reshape(1, 1)                 # word-context scalar
    kernel = functools.partial(_layerk_kernel, hid=hid, alpha=alpha)
    return pl.pallas_call(
        kernel,
        out_shape=jax.ShapeDtypeStruct((B, N, hid), BF16),
        grid=(B,),
        in_specs=[
            pl.BlockSpec((None, N, hid), lambda b: (b, 0, 0)),
            pl.BlockSpec((None, N, N), lambda b: (b, 0, 0)),
            pl.BlockSpec((hid, hid), lambda b: (0, 0)),
            pl.BlockSpec((hid, hid), lambda b: (0, 0)),
            pl.BlockSpec((hid, 2 * hid), lambda b: (0, 0)),
            pl.BlockSpec((1, hid), lambda b: (0, 0)),
            pl.BlockSpec((hid, hid), lambda b: (0, 0)),
            pl.BlockSpec((1, hid), lambda b: (0, 0)),
            pl.BlockSpec((hid, 1), lambda b: (0, 0)),
            pl.BlockSpec((1, hid), lambda b: (0, 0)),
            pl.BlockSpec((1, 1), lambda b: (0, 0)),
        ],
        out_specs=pl.BlockSpec((None, N, hid), lambda b: (b, 0, 0)),
        compiler_params=pltpu.CompilerParams(dimension_semantics=("parallel",)),
    )(x.astype(BF16), adj.astype(BF16),
      vae_p["W1"].astype(BF16), vae_p["W_mu"].astype(BF16),
      wp.astype(BF16), hg_p["b"].reshape(1, hid).astype(F32),
      hg_p["weight3"].astype(BF16),
      a_x_row.astype(BF16), a2_x_col.astype(BF16), a2_e_row.astype(BF16),
      const.astype(F32))


# ----------------------------------------------------------------------------
# Kernel 3: MultiCNN (per-position 'same' conv -> relu -> concat -> linear),
#           fused per batch; im2col realized as shifted VMEM slices.
# ----------------------------------------------------------------------------
def _cnn_kernel(xp_ref, *refs, filter_sizes, hid, n, maxleft, out_dim):
    out_ref = refs[-1]
    fcb_ref = refs[-2]
    fcw_ref = refs[-3]
    xp = xp_ref[...]                                   # (N + pad, hid) bf16
    acc_out = jnp.zeros((n, out_dim), F32)
    for idx, fs in enumerate(filter_sizes):
        b_ref = refs[2 * idx + 1]
        left = (fs - 1) // 2
        conv = jnp.zeros((n, hid), F32)
        for t in range(fs):
            start = maxleft - left + t                 # static shift -> VMEM slice
            win = xp[start:start + n, :]
            wt = refs[2 * idx][t]                      # (hid, hid) tap weight
            conv = conv + jnp.dot(win, wt, preferred_element_type=F32)
        conv = jnp.maximum(conv + b_ref[...], 0.0)     # ReLU
        # "concat then fc" == sum over filters of conv_f @ fc_W[f-block]
        acc_out = acc_out + jnp.dot(conv.astype(BF16), fcw_ref[idx],
                                    preferred_element_type=F32)
    out_ref[...] = (acc_out + fcb_ref[...]).astype(out_ref.dtype)


def multi_cnn_forward(x, cnn_p, filter_sizes, hid, out_dim):
    B, N, D = x.shape
    filter_sizes = tuple(filter_sizes)
    nf = len(filter_sizes)
    maxleft = max((fs - 1) // 2 for fs in filter_sizes)
    maxright = max(fs - 1 - (fs - 1) // 2 for fs in filter_sizes)
    P = maxleft + maxright
    xp = jnp.pad(x, ((0, 0), (maxleft, maxright), (0, 0)))          # tiny halo only

    in_specs = [pl.BlockSpec((None, N + P, D), lambda b: (b, 0, 0))]
    args = [xp.astype(BF16)]
    for fs, cp in zip(filter_sizes, cnn_p["convs"]):
        in_specs.append(pl.BlockSpec((fs, hid, hid), lambda b: (0, 0, 0)))
        in_specs.append(pl.BlockSpec((1, hid), lambda b: (0, 0)))
        args.append(cp["W"].reshape(fs, hid, hid).astype(BF16))
        args.append(cp["b"].reshape(1, hid).astype(F32))
    in_specs.append(pl.BlockSpec((nf, hid, out_dim), lambda b: (0, 0, 0)))
    in_specs.append(pl.BlockSpec((1, out_dim), lambda b: (0, 0)))
    args.append(cnn_p["fc_W"].reshape(nf, hid, out_dim).astype(BF16))
    args.append(cnn_p["fc_b"].reshape(1, out_dim).astype(F32))

    kernel = functools.partial(_cnn_kernel, filter_sizes=filter_sizes, hid=hid,
                               n=N, maxleft=maxleft, out_dim=out_dim)
    return pl.pallas_call(
        kernel,
        out_shape=jax.ShapeDtypeStruct((B, N, out_dim), BF16),
        grid=(B,),
        in_specs=in_specs,
        out_specs=pl.BlockSpec((None, N, out_dim), lambda b: (b, 0, 0)),
        compiler_params=pltpu.CompilerParams(dimension_semantics=("parallel",)),
    )(*args)


# ----------------------------------------------------------------------------
# Kernel 4: classification head  logits = log_softmax(sum_N(g_out) @ Wp + bp)
# ----------------------------------------------------------------------------
def _head_kernel(g_ref, w_ref, b_ref, o_ref):
    s = jnp.sum(g_ref[...].astype(F32), axis=1)        # (tb, D)
    y = jnp.dot(s.astype(BF16), w_ref[...], preferred_element_type=F32) + b_ref[...]
    y = y - jnp.max(y, axis=-1, keepdims=True)
    lse = jnp.log(jnp.sum(jnp.exp(y), axis=-1, keepdims=True))
    o_ref[...] = y - lse


def head_logsoftmax(g_out, w, b):
    B, N, D = g_out.shape
    C = w.shape[1]
    tb = B  # TODO(synk): for production batches use a multiple-of-8 batch tile (v7x VMEM).
    return pl.pallas_call(
        _head_kernel,
        out_shape=jax.ShapeDtypeStruct((B, C), F32),
        grid=(pl.cdiv(B, tb),),
        in_specs=[
            pl.BlockSpec((tb, N, D), lambda i: (i, 0, 0)),
            pl.BlockSpec((D, C), lambda i: (0, 0)),
            pl.BlockSpec((1, C), lambda i: (0, 0)),
        ],
        out_specs=pl.BlockSpec((tb, C), lambda i: (i, 0)),
        compiler_params=pltpu.CompilerParams(dimension_semantics=("parallel",)),
    )(g_out.astype(BF16), w.astype(BF16), b.reshape(1, C).astype(F32))


# ----------------------------------------------------------------------------
# Parameter init (deterministic, synthetic)
# ----------------------------------------------------------------------------
def init_params(key, H, hid, out_dim, C, vocab, filter_sizes, num_layers):
    keys = iter(jax.random.split(key, 64))

    def nrm(shape):
        return 0.1 * jax.random.normal(next(keys), shape, F32)

    p = {"embed": nrm((vocab, H))}
    p["vae"] = []
    for k in range(num_layers):
        din = H if k == 0 else hid
        p["vae"].append({"W1": nrm((din, hid)),
                         "W_mu": nrm((hid, hid)),
                         "W_logvar": nrm((hid, hid))})   # unused in eval
    p["gc0"] = {"W": nrm((H, hid)), "b": nrm((hid,))}
    p["hgat"] = []
    for _ in range(num_layers - 1):
        p["hgat"].append({
            "W": nrm((hid, hid)), "b": nrm((hid,)),
            "weight2": nrm((hid, hid)), "weight3": nrm((hid, hid)),
            "a": nrm((2 * hid, 1)), "a2": nrm((2 * hid, 1)),
            "wc": nrm((hid,)),
        })
    p["cnn"] = {
        "convs": [{"W": nrm((fs * hid, hid)), "b": nrm((hid,))} for fs in filter_sizes],
        "fc_W": nrm((len(filter_sizes) * hid, out_dim)),
        "fc_b": nrm((out_dim,)),
    }
    p["pred_W"] = nrm((out_dim, C))
    p["pred_b"] = nrm((C,))
    return p


# ----------------------------------------------------------------------------
# Full forward (mirrors GraphESHGAT.forward, eval mode)
# ----------------------------------------------------------------------------
def graph_eshgat_forward(params, input_ids, attention_mask, adjmat, cfg):
    hid = cfg["hid_dim"]
    # TODO(synk): pretrained encoder replaced by deterministic embedding lookup.
    g_hid = params["embed"][input_ids] * attention_mask[..., None].astype(F32)
    for k in range(cfg["num_layers"]):
        if k == 0:
            g_hid = layer0_forward(g_hid, adjmat, params["vae"][0], params["gc0"], hid)
        else:
            g_hid = hgat_layer_forward(g_hid, adjmat, params["vae"][k],
                                       params["hgat"][k - 1], hid, alpha=0.1)
    g_out = multi_cnn_forward(g_hid, params["cnn"], cfg["filter_sizes"], hid,
                              cfg["out_dim"])
    return head_logsoftmax(g_out, params["pred_W"], params["pred_b"])


if __name__ == "__main__":
    key = jax.random.PRNGKey(0)
    B, N = 2, 8
    H = 32          # stand-in for pretrain.config.hidden_size
    vocab = 50
    cfg = dict(num_layers=2, hid_dim=32, out_dim=32, dropout=0.1,
               filter_sizes=(2, 3), class_size=4)

    k_ids, k_adj, k_par = jax.random.split(key, 3)
    input_ids = jax.random.randint(k_ids, (B, N), 0, vocab, dtype=jnp.int32)
    attention_mask = jnp.ones((B, N), dtype=jnp.int32)
    raw = (jax.random.uniform(k_adj, (B, N, N)) > 0.5).astype(F32)
    adjmat = jnp.clip(raw + jnp.transpose(raw, (0, 2, 1)) + jnp.eye(N)[None], 0.0, 1.0)
    adjmat = adjmat / jnp.sum(adjmat, axis=-1, keepdims=True)

    params = init_params(k_par, H, cfg["hid_dim"], cfg["out_dim"],
                         cfg["class_size"], vocab, cfg["filter_sizes"],
                         cfg["num_layers"])

    logits = graph_eshgat_forward(params, input_ids, attention_mask, adjmat, cfg)
    jax.block_until_ready(logits)
    assert logits.shape == (B, cfg["class_size"])
    assert bool(jnp.all(jnp.isfinite(logits)))
    print("KERNEL_OK")
</pallas_src>

<mosaic_0001>
module attributes {stable_mosaic.version = 11 : i64} {
  func.func @_layer0_kernel(%arg0: i32, %arg1: memref<1x8x32xbf16, #tpu.memory_space<vmem>>, %arg2: memref<1x8x8xbf16, #tpu.memory_space<vmem>>, %arg3: memref<32x32xbf16, #tpu.memory_space<vmem>>, %arg4: memref<32x32xbf16, #tpu.memory_space<vmem>>, %arg5: memref<32x32xbf16, #tpu.memory_space<vmem>>, %arg6: memref<1x32xf32, #tpu.memory_space<vmem>>, %arg7: memref<1x8x32xbf16, #tpu.memory_space<vmem>>) attributes {dimension_semantics = [#tpu.dimension_semantics<parallel>], iteration_bounds = array<i64: 2>, scalar_prefetch = 0 : i64, scratch_operands = 0 : i64, tpu.core_type = #tpu.core_type<tc>, window_params = [{transform_indices = @transform_0, window_bounds = array<i64: 1, 8, 32>}, {transform_indices = @transform_1, window_bounds = array<i64: 1, 8, 8>}, {pipeline_mode = #tpu.pipeline_mode<synchronous>, transform_indices = @transform_2, window_bounds = array<i64: 32, 32>}, {pipeline_mode = #tpu.pipeline_mode<synchronous>, transform_indices = @transform_3, window_bounds = array<i64: 32, 32>}, {pipeline_mode = #tpu.pipeline_mode<synchronous>, transform_indices = @transform_4, window_bounds = array<i64: 32, 32>}, {pipeline_mode = #tpu.pipeline_mode<synchronous>, transform_indices = @transform_5, window_bounds = array<i64: 1, 32>}, {transform_indices = @transform_6, window_bounds = array<i64: 1, 8, 32>}]} {
    %c0 = arith.constant 0 : index
    %c0_0 = arith.constant 0 : index
    %c0_1 = arith.constant 0 : index
    %0 = vector.load %arg1[%c0, %c0_0, %c0_1] : memref<1x8x32xbf16, #tpu.memory_space<vmem>>, vector<1x8x32xbf16>
    %1 = vector.shape_cast %0 : vector<1x8x32xbf16> to vector<8x32xbf16>
    %c0_2 = arith.constant 0 : index
    %c0_3 = arith.constant 0 : index
    %c0_4 = arith.constant 0 : index
    %2 = vector.load %arg2[%c0_2, %c0_3, %c0_4] : memref<1x8x8xbf16, #tpu.memory_space<vmem>>, vector<1x8x8xbf16>
    %3 = vector.shape_cast %2 : vector<1x8x8xbf16> to vector<8x8xbf16>
    %c0_5 = arith.constant 0 : index
    %c0_6 = arith.constant 0 : index
    %4 = vector.load %arg3[%c0_5, %c0_6] : memref<32x32xbf16, #tpu.memory_space<vmem>>, vector<32x32xbf16>
    %c0_7 = arith.constant 0 : index
    %c0_8 = arith.constant 0 : index
    %5 = vector.load %arg4[%c0_7, %c0_8] : memref<32x32xbf16, #tpu.memory_space<vmem>>, vector<32x32xbf16>
    %cst = arith.constant dense<0.000000e+00> : vector<8x32xf32>
    %6 = tpu.matmul %1, %4, %cst {dimension_numbers = #tpu.dot_dimension_numbers<[1], [0], [0], [1], [0, 0, 1, 1], [], []>} : vector<8x32xbf16>, vector<32x32xbf16>, vector<8x32xf32> -> vector<8x32xf32>
    %7 = arith.truncf %6 : vector<8x32xf32> to vector<8x32xbf16>
    %cst_9 = arith.constant dense<0.000000e+00> : vector<8x32xf32>
    %8 = tpu.matmul %3, %7, %cst_9 {dimension_numbers = #tpu.dot_dimension_numbers<[1], [0], [0], [1], [0, 0, 1, 1], [], []>} : vector<8x8xbf16>, vector<8x32xbf16>, vector<8x32xf32> -> vector<8x32xf32>
    %cst_10 = arith.constant 0.000000e+00 : f32
    %9 = vector.broadcast %cst_10 : f32 to vector<8x32xf32>
    %10 = arith.maximumf %8, %9 : vector<8x32xf32>
    %11 = arith.truncf %10 : vector<8x32xf32> to vector<8x32xbf16>
    %cst_11 = arith.constant dense<0.000000e+00> : vector<8x32xf32>
    %12 = tpu.matmul %11, %5, %cst_11 {dimension_numbers = #tpu.dot_dimension_numbers<[1], [0], [0], [1], [0, 0, 1, 1], [], []>} : vector<8x32xbf16>, vector<32x32xbf16>, vector<8x32xf32> -> vector<8x32xf32>
    %13 = arith.truncf %12 : vector<8x32xf32> to vector<8x32xbf16>
    %cst_12 = arith.constant dense<0.000000e+00> : vector<8x32xf32>
    %14 = tpu.matmul %3, %13, %cst_12 {dimension_numbers = #tpu.dot_dimension_numbers<[1], [0], [0], [1], [0, 0, 1, 1], [], []>} : vector<8x8xbf16>, vector<8x32xbf16>, vector<8x32xf32> -> vector<8x32xf32>
    %15 = arith.truncf %14 : vector<8x32xf32> to vector<8x32xbf16>
    %cst_13 = arith.constant dense<0.000000e+00> : vector<8x8xf32>
    %16 = tpu.matmul %15, %15, %cst_13 {dimension_numbers = #tpu.dot_dimension_numbers<[1], [1], [0], [0], [0, 0, 1, 0], [], []>} : vector<8x32xbf16>, vector<8x32xbf16>, vector<8x8xf32> -> vector<8x8xf32>
    %17 = arith.negf %16 : vector<8x8xf32>
    %18 = math.exp %17 : vector<8x8xf32>
    %cst_14 = arith.constant 1.000000e+00 : f32
    %19 = vector.broadcast %cst_14 : f32 to vector<8x8xf32>
    %20 = arith.addf %19, %18 : vector<8x8xf32>
    %21 = arith.divf %19, %20 : vector<8x8xf32>
    %22 = arith.truncf %21 : vector<8x8xf32> to vector<8x8xbf16>
    %c0_15 = arith.constant 0 : index
    %c0_16 = arith.constant 0 : index
    %23 = vector.load %arg5[%c0_15, %c0_16] : memref<32x32xbf16, #tpu.memory_space<vmem>>, vector<32x32xbf16>
    %cst_17 = arith.constant dense<0.000000e+00> : vector<8x32xf32>
    %24 = tpu.matmul %1, %23, %cst_17 {dimension_numbers = #tpu.dot_dimension_numbers<[1], [0], [0], [1], [0, 0, 1, 1], [], []>} : vector<8x32xbf16>, vector<32x32xbf16>, vector<8x32xf32> -> vector<8x32xf32>
    %25 = arith.truncf %24 : vector<8x32xf32> to vector<8x32xbf16>
    %cst_18 = arith.constant dense<0.000000e+00> : vector<8x32xf32>
    %26 = tpu.matmul %22, %25, %cst_18 {dimension_numbers = #tpu.dot_dimension_numbers<[1], [0], [0], [1], [0, 0, 1, 1], [], []>} : vector<8x8xbf16>, vector<8x32xbf16>, vector<8x32xf32> -> vector<8x32xf32>
    %c0_19 = arith.constant 0 : index
    %c0_20 = arith.constant 0 : index
    %27 = vector.load %arg6[%c0_19, %c0_20] : memref<1x32xf32, #tpu.memory_space<vmem>>, vector<1x32xf32>
    %28 = vector.broadcast %27 : vector<1x32xf32> to vector<8x32xf32>
    %29 = arith.addf %26, %28 : vector<8x32xf32>
    %30 = arith.truncf %29 : vector<8x32xf32> to vector<8x32xbf16>
    %c0_21 = arith.constant 0 : index
    %c0_22 = arith.constant 0 : index
    %c0_23 = arith.constant 0 : index
    %31 = vector.load %arg7[%c0_21, %c0_22, %c0_23] : memref<1x8x32xbf16, #tpu.memory_space<vmem>>, vector<1x8x32xbf16>
    %32 = vector.shape_cast %31 : vector<1x8x32xbf16> to vector<8x32xbf16>
    %33 = vector.shape_cast %30 : vector<8x32xbf16> to vector<1x8x32xbf16>
    tpu.vector_store %arg7[%c0_21, %c0_22, %c0_23], %33 {strides = array<i32>} : memref<1x8x32xbf16, #tpu.memory_space<vmem>>, vector<1x8x32xbf16>,
    return
  }
  func.func @transform_0(%arg0: i32) -> (i32, i32, i32) {
    %c0_i32 = arith.constant 0 : i32
    %c0_i32_0 = arith.constant 0 : i32
    %c0_i32_1 = arith.constant 0 : i32
    return %arg0, %c0_i32, %c0_i32_0 : i32, i32, i32
  }
  func.func @transform_1(%arg0: i32) -> (i32, i32, i32) {
    %c0_i32 = arith.constant 0 : i32
    %c0_i32_0 = arith.constant 0 : i32
    %c0_i32_1 = arith.constant 0 : i32
    return %arg0, %c0_i32, %c0_i32_0 : i32, i32, i32
  }
  func.func @transform_2(%arg0: i32) -> (i32, i32) {
    %c0_i32 = arith.constant 0 : i32
    %c0_i32_0 = arith.constant 0 : i32
    %c0_i32_1 = arith.constant 0 : i32
    return %c0_i32, %c0_i32_0 : i32, i32
  }
  func.func @transform_3(%arg0: i32) -> (i32, i32) {
    %c0_i32 = arith.constant 0 : i32
    %c0_i32_0 = arith.constant 0 : i32
    %c0_i32_1 = arith.constant 0 : i32
    return %c0_i32, %c0_i32_0 : i32, i32
  }
  func.func @transform_4(%arg0: i32) -> (i32, i32) {
    %c0_i32 = arith.constant 0 : i32
    %c0_i32_0 = arith.constant 0 : i32
    %c0_i32_1 = arith.constant 0 : i32
    return %c0_i32, %c0_i32_0 : i32, i32
  }
  func.func @transform_5(%arg0: i32) -> (i32, i32) {
    %c0_i32 = arith.constant 0 : i32
    %c0_i32_0 = arith.constant 0 : i32
    %c0_i32_1 = arith.constant 0 : i32
    return %c0_i32, %c0_i32_0 : i32, i32
  }
  func.func @transform_6(%arg0: i32) -> (i32, i32, i32) {
    %c0_i32 = arith.constant 0 : i32
    %c0_i32_0 = arith.constant 0 : i32
    %c0_i32_1 = arith.constant 0 : i32
    return %arg0, %c0_i32, %c0_i32_0 : i32, i32, i32
  }
}

</mosaic_0001>

<llo_original>
// kernel: tpu_custom_call.1
$region0: #{tpu_custom_call.1}
  #allocation0 [shape = 'u32[]', space=smem, size = 0x4, offset = 0x4, fixed_abs, tag = 'smem constant byte address 0x4 - core index']
  #allocation1 [shape = 'u32[144,128]{1,0:T(1,128)}', space=vmem, size = 0x12000, scoped, tag = 'internal scratch']
  %s0 = inlined_call_operand.hbm [shape: bf16[2,8,32], index: 0, kind: input, shape index: {}]
  %s1 = inlined_call_operand.hbm [shape: bf16[2,8,8], index: 1, kind: input, shape index: {}]
  %s2 = inlined_call_operand.hbm [shape: bf16[32,32], index: 2, kind: input, shape index: {}]
  %s3 = inlined_call_operand.hbm [shape: bf16[32,32], index: 3, kind: input, shape index: {}]
  %s4 = inlined_call_operand.hbm [shape: bf16[32,32], index: 4, kind: input, shape index: {}]
  %s5 = inlined_call_operand.vmem [shape: f32[1,32], index: 5, kind: input, shape index: {}]
  %s6 = inlined_call_operand.hbm [shape: bf16[2,8,32], index: 6, kind: output, shape index: {}]
  %s7 = sld [smem:[#allocation0]]
  $region77: #{tpu_custom_call.1} parent=0
    _
  %s9 = ssub.s32 1, %s7
  %s10 = scalar_select 0, %s9, %s7
  $region1: #{tpu_custom_call.1} parent=0
    #allocation2 [shape = 'u8[4096]{0}', space=vmem, size = 0x1000, scoped, tag = 'input window, operand 0']
    #allocation3 [shape = 's32[2]{0}', space=sflag, size = 0x8, scoped, tag = 'scoped memory for tpu_custom_call.1']
    #allocation4 [shape = 's32[2]{0}', space=sflag, size = 0x8, scoped, tag = 'scoped memory for tpu_custom_call.1']
    #allocation5 [shape = 'u8[4096]{0}', space=vmem, size = 0x1000, scoped, tag = 'input window, operand 1']
    #allocation6 [shape = 's32[2]{0}', space=sflag, size = 0x8, scoped, tag = 'scoped memory for tpu_custom_call.1']
    #allocation7 [shape = 'u8[8192]{0}', space=vmem, size = 0x2000, scoped, tag = 'input window, operand 2, single buffered']
    #allocation8 [shape = 'u8[8192]{0}', space=vmem, size = 0x2000, scoped, tag = 'input window, operand 3, single buffered']
    #allocation9 [shape = 's32[1]{0}', space=sflag, size = 0x4, scoped, tag = 'scoped memory for tpu_custom_call.1']
    #allocation10 [shape = 'u8[8192]{0}', space=vmem, size = 0x2000, scoped, tag = 'input window, operand 4, single buffered']
    #allocation11 [shape = 'u8[4096]{0}', space=vmem, size = 0x1000, scoped, tag = 'output window, operand 0']
    %11 = vsyncpa [#allocation3], 0
    %s12 = scalar_lea.sflag [#allocation3], 1
    %13 = vsyncpa %s12, 0
    %14 = vsyncpa [#allocation6], 0
    %s15 = scalar_lea.sflag [#allocation6], 1
    %16 = vsyncpa %s15, 0
    %17 = vsyncpa [#allocation9], 0
    %18 = vsyncpa [#allocation4], 0
    %s19 = scalar_lea.sflag [#allocation4], 1
    %20 = vsyncpa %s19, 0
    loop: start=0, step=1, limit=4
    $region2: #{tpu_custom_call.1} parent=1 // loop_pre_header
      _
    $region3: #{tpu_custom_call.1} parent=1 // loop_header
      %s22 = sphi 0, %s26
      %p23 = scmp.ge.s32.totalorder %s22, 4
      %s32 = sphi 0, %s34
      %s35 = sphi 0, %s32
      %s36 = sphi 0, %s35
      %s52 = sphi 0, %s36
      %s58 = sphi 0, %s60
      %s61 = sphi 0, %s58
      %s62 = sphi 0, %s61
      %s78 = sphi 0, %s62
      %s82 = sphi 0, %s82
      %s84 = sphi 0, %s82
      %s85 = sphi 0, %s84
      %s99 = sphi 0, %s85
      %s103 = sphi 0, %s103
      %s105 = sphi 0, %s103
      %s106 = sphi 0, %s105
      %s120 = sphi 0, %s106
      %s124 = sphi 0, %s124
      %s126 = sphi 0, %s124
      %s127 = sphi 0, %s126
      %s141 = sphi 0, %s127
      %s145 = sphi 0, %s145
      %s147 = sphi 0, %s145
      %s148 = sphi 0, %s147
      %s162 = sphi 0, %s148
      %s168 = sphi 0, %s170
      %s171 = sphi 0, %s168
      %s172 = sphi 0, %s171
      %s188 = sphi 0, %s172
    $region4: #{tpu_custom_call.1} parent=1 // loop_header_branch
      %25 = sbr.rel (%p23) target = $region8
    $region5: #{tpu_custom_call.1} parent=1 // loop_body
      %s27 = ssub.s32 %s22, 1
      %s28 = ssub.s32 %s22, 2
      %s29 = sadd.s32 %s22, 1
      %s30 = ssub.s32 %s22, %s29
      %p31 = scmp.eq.s32.totalorder %s30, 0
      %s33 = sadd.s32 %s32, 1
      %s34 = scalar_select %p31, %s32, %s33
      %p37 = pneg %p31
      %p38 = scmp.eq.s32.totalorder %s22, 1
      %p39 = por %p37, %p38
      %p40 = scmp.ne.s32.totalorder %s32, %s35
      %p41 = scmp.eq.s32.totalorder %s22, 0
      %p42 = por %p40, %p41
      %p43 = scmp.ne.s32.totalorder %s32, %s35
      %p44 = scmp.eq.s32.totalorder %s27, 1
      %p45 = por %p43, %p44
      %p46 = scmp.ne.s32.totalorder %s35, %s36
      %p47 = scmp.eq.s32.totalorder %s27, 0
      %p48 = por %p46, %p47
      %p49 = scmp.ne.s32.totalorder %s35, %s36
      %p50 = scmp.eq.s32.totalorder %s28, 1
      %p51 = por %p49, %p50
      %p53 = scmp.ne.s32.totalorder %s36, %s52
      %p54 = scmp.eq.s32.totalorder %s28, 0
      %p55 = por %p53, %p54
      %s56 = ssub.s32 %s22, %s29
      %p57 = scmp.eq.s32.totalorder %s56, 0
      %s59 = sadd.s32 %s58, 1
      %s60 = scalar_select %p57, %s58, %s59
      %p63 = pneg %p57
      %p64 = scmp.eq.s32.totalorder %s22, 1
      %p65 = por %p63, %p64
      %p66 = scmp.ne.s32.totalorder %s58, %s61
      %p67 = scmp.eq.s32.totalorder %s22, 0
      %p68 = por %p66, %p67
      %p69 = scmp.ne.s32.totalorder %s58, %s61
      %p70 = scmp.eq.s32.totalorder %s27, 1
      %p71 = por %p69, %p70
      %p72 = scmp.ne.s32.totalorder %s61, %s62
      %p73 = scmp.eq.s32.totalorder %s27, 0
      %p74 = por %p72, %p73
      %p75 = scmp.ne.s32.totalorder %s61, %s62
      %p76 = scmp.eq.s32.totalorder %s28, 1
      %p77 = por %p75, %p76
      %p79 = scmp.ne.s32.totalorder %s62, %s78
      %p80 = scmp.eq.s32.totalorder %s28, 0
      %p81 = por %p79, %p80
      %s83 = sadd.s32 %s82, 1
      %p86 = scmp.eq.s32.totalorder %s22, 1
      %p87 = scmp.ne.s32.totalorder %s82, %s84
      %p88 = scmp.eq.s32.totalorder %s22, 0
      %p89 = por %p87, %p88
      %p90 = scmp.ne.s32.totalorder %s82, %s84
      %p91 = scmp.eq.s32.totalorder %s27, 1
      %p92 = por %p90, %p91
      %p93 = scmp.ne.s32.totalorder %s84, %s85
      %p94 = scmp.eq.s32.totalorder %s27, 0
      %p95 = por %p93, %p94
      %p96 = scmp.ne.s32.totalorder %s84, %s85
      %p97 = scmp.eq.s32.totalorder %s28, 1
      %p98 = por %p96, %p97
      %p100 = scmp.ne.s32.totalorder %s85, %s99
      %p101 = scmp.eq.s32.totalorder %s28, 0
      %p102 = por %p100, %p101
      %s104 = sadd.s32 %s103, 1
      %p107 = scmp.eq.s32.totalorder %s22, 1
      %p108 = scmp.ne.s32.totalorder %s103, %s105
      %p109 = scmp.eq.s32.totalorder %s22, 0
      %p110 = por %p108, %p109
      %p111 = scmp.ne.s32.totalorder %s103, %s105
      %p112 = scmp.eq.s32.totalorder %s27, 1
      %p113 = por %p111, %p112
      %p114 = scmp.ne.s32.totalorder %s105, %s106
      %p115 = scmp.eq.s32.totalorder %s27, 0
      %p116 = por %p114, %p115
      %p117 = scmp.ne.s32.totalorder %s105, %s106
      %p118 = scmp.eq.s32.totalorder %s28, 1
      %p119 = por %p117, %p118
      %p121 = scmp.ne.s32.totalorder %s106, %s120
      %p122 = scmp.eq.s32.totalorder %s28, 0
      %p123 = por %p121, %p122
      %s125 = sadd.s32 %s124, 1
      %p128 = scmp.eq.s32.totalorder %s22, 1
      %p129 = scmp.ne.s32.totalorder %s124, %s126
      %p130 = scmp.eq.s32.totalorder %s22, 0
      %p131 = por %p129, %p130
      %p132 = scmp.ne.s32.totalorder %s124, %s126
      %p133 = scmp.eq.s32.totalorder %s27, 1
      %p134 = por %p132, %p133
      %p135 = scmp.ne.s32.totalorder %s126, %s127
      %p136 = scmp.eq.s32.totalorder %s27, 0
      %p137 = por %p135, %p136
      %p138 = scmp.ne.s32.totalorder %s126, %s127
      %p139 = scmp.eq.s32.totalorder %s28, 1
      %p140 = por %p138, %p139
      %p142 = scmp.ne.s32.totalorder %s127, %s141
      %p143 = scmp.eq.s32.totalorder %s28, 0
      %p144 = por %p142, %p143
      %s146 = sadd.s32 %s145, 1
      %p149 = scmp.eq.s32.totalorder %s22, 1
      %p150 = scmp.ne.s32.totalorder %s145, %s147
      %p151 = scmp.eq.s32.totalorder %s22, 0
      %p152 = por %p150, %p151
      %p153 = scmp.ne.s32.totalorder %s145, %s147
      %p154 = scmp.eq.s32.totalorder %s27, 1
      %p155 = por %p153, %p154
      %p156 = scmp.ne.s32.totalorder %s147, %s148
      %p157 = scmp.eq.s32.totalorder %s27, 0
      %p158 = por %p156, %p157
      %p159 = scmp.ne.s32.totalorder %s147, %s148
      %p160 = scmp.eq.s32.totalorder %s28, 1
      %p161 = por %p159, %p160
      %p163 = scmp.ne.s32.totalorder %s148, %s162
      %p164 = scmp.eq.s32.totalorder %s28, 0
      %p165 = por %p163, %p164
      %s166 = ssub.s32 %s22, %s29
      %p167 = scmp.eq.s32.totalorder %s166, 0
      %s169 = sadd.s32 %s168, 1
      %s170 = scalar_select %p167, %s168, %s169
      %p173 = pneg %p167
      %p174 = scmp.eq.s32.totalorder %s22, 1
      %p175 = por %p173, %p174
      %p176 = scmp.ne.s32.totalorder %s168, %s171
      %p177 = scmp.eq.s32.totalorder %s22, 0
      %p178 = por %p176, %p177
      %p179 = scmp.ne.s32.totalorder %s168, %s171
      %p180 = scmp.eq.s32.totalorder %s27, 1
      %p181 = por %p179, %p180
      %p182 = scmp.ne.s32.totalorder %s171, %s172
      %p183 = scmp.eq.s32.totalorder %s27, 0
      %p184 = por %p182, %p183
      %p185 = scmp.ne.s32.totalorder %s171, %s172
      %p186 = scmp.eq.s32.totalorder %s28, 1
      %p187 = por %p185, %p186
      %p189 = scmp.ne.s32.totalorder %s172, %s188
      %p190 = scmp.eq.s32.totalorder %s28, 0
      %p191 = por %p189, %p190
      %p192 = scmp.le.s32.totalorder 1, %s22
      %p193 = scmp.lt.s32.totalorder %s22, 3
      %p194 = pnand %p192, %p193
      %p195 = pneg %p194
      // Predicated region
      $region9: #{tpu_custom_call.1} parent=5 // pred_check
        _
      $region10: #{tpu_custom_call.1} parent=5 // pred_check_branch
        %197 = sbr.rel (%p194) target = $region12
      $region11: #{tpu_custom_call.1} parent=5 // pred_region
        %s198 = ssub.s32 %s22, 1
        // Predicated region
        $region13: #{tpu_custom_call.1} parent=11 // pred_check
          %p199 = pneg %p95
        $region14: #{tpu_custom_call.1} parent=11 // pred_check_branch
          %201 = sbr.rel (%p199) target = $region16
        $region15: #{tpu_custom_call.1} parent=11 // pred_region
          %s203 = ssub.s32 256, 256
          %204 = vsyncadd [#allocation6], %s203
          %s205 = sshll.u32 [#allocation7], 4
          %s206 = int_to_ptr.vmem [resolvable:$true] %s205
          %211 = dma.hbm_to_vmem [thread:$0]  %s2, 256, %s206, [#allocation6], 64, 64, 4
        $region16: #{tpu_custom_call.1} parent=11 // pred_fallthru
          _
        // Predicated region
        $region17: #{tpu_custom_call.1} parent=11 // pred_check
          %p212 = pneg %p116
        $region18: #{tpu_custom_call.1} parent=11 // pred_check_branch
          %214 = sbr.rel (%p212) target = $region20
        $region19: #{tpu_custom_call.1} parent=11 // pred_region
          %s216 = ssub.s32 256, 256
          %217 = vsyncadd [#allocation9], %s216
          %s218 = sshll.u32 [#allocation8], 4
          %s219 = int_to_ptr.vmem [resolvable:$true] %s218
          %224 = dma.hbm_to_vmem [thread:$0]  %s3, 256, %s219, [#allocation9], 64, 64, 4
        $region20: #{tpu_custom_call.1} parent=11 // pred_fallthru
          _
        // Predicated region
        $region21: #{tpu_custom_call.1} parent=11 // pred_check
          %p225 = pneg %p137
        $region22: #{tpu_custom_call.1} parent=11 // pred_check_branch
          %227 = sbr.rel (%p225) target = $region24
        $region23: #{tpu_custom_call.1} parent=11 // pred_region
          %s229 = ssub.s32 256, 256
          %230 = vsyncadd [#allocation9], %s229
          %s231 = sshll.u32 [#allocation10], 4
          %s232 = int_to_ptr.vmem [resolvable:$true] %s231
          %237 = dma.hbm_to_vmem [thread:$0]  %s4, 256, %s232, [#allocation9], 64, 64, 4
        $region24: #{tpu_custom_call.1} parent=11 // pred_fallthru
          _
        // Predicated region
        $region25: #{tpu_custom_call.1} parent=11 // pred_check
          %p238 = pneg %p158
        $region26: #{tpu_custom_call.1} parent=11 // pred_check_branch
          %240 = sbr.rel (%p238) target = $region28
        $region27: #{tpu_custom_call.1} parent=11 // pred_region
          _
        $region28: #{tpu_custom_call.1} parent=11 // pred_fallthru
          _
      $region12: #{tpu_custom_call.1} parent=5 // pred_fallthru
        _
      %p241 = scmp.lt.s32.totalorder %s22, 2
      // Predicated region
      $region29: #{tpu_custom_call.1} parent=5 // pred_check
        %p242 = pneg %p241
      $region30: #{tpu_custom_call.1} parent=5 // pred_check_branch
        %244 = sbr.rel (%p242) target = $region32
      $region31: #{tpu_custom_call.1} parent=5 // pred_region
        // Predicated region
        $region33: #{tpu_custom_call.1} parent=31 // pred_check
          %p245 = pneg %p42
        $region34: #{tpu_custom_call.1} parent=31 // pred_check_branch
          %247 = sbr.rel (%p245) target = $region36
        $region35: #{tpu_custom_call.1} parent=31 // pred_region
          %s248 = sand.u32 %s32, 1
          %s249 = scalar_lea.sflag [#allocation3], %s248
          %s250 = sand.u32 %s32, 1
          %s251 = smul.addr %s250, 4
          %s252 = scalar_lea.vmem [#allocation2], %s251
          %s254 = ssub.s32 64, 64
          %255 = vsyncadd %s249, %s254
          %s256 = smul.addr %s22, 64
          %s257 = scalar_lea.hbm %s0, %s256
          %s259 = sshll.u32 %s252, 4
          %s260 = int_to_ptr.vmem [resolvable:$true] %s259
          %262 = dma.hbm_to_vmem [thread:$0]  %s257, 64, %s260, %s249
        $region36: #{tpu_custom_call.1} parent=31 // pred_fallthru
          _
        // Predicated region
        $region37: #{tpu_custom_call.1} parent=31 // pred_check
          %p263 = pneg %p68
        $region38: #{tpu_custom_call.1} parent=31 // pred_check_branch
          %265 = sbr.rel (%p263) target = $region40
        $region39: #{tpu_custom_call.1} parent=31 // pred_region
          %s266 = sand.u32 %s22, 1
          %s267 = scalar_lea.sflag [#allocation6], %s266
          %s268 = sand.u32 %s58, 1
          %s269 = smul.addr %s268, 4
          %s270 = scalar_lea.vmem [#allocation5], %s269
          %s272 = ssub.s32 64, 64
          %273 = vsyncadd %s267, %s272
          %s274 = smul.addr %s22, 64
          %s275 = scalar_lea.hbm %s1, %s274
          %s277 = sshll.u32 %s270, 4
          %s278 = int_to_ptr.vmem [resolvable:$true] %s277
          %280 = dma.hbm_to_vmem [thread:$0]  %s275, 64, %s278, %s267
        $region40: #{tpu_custom_call.1} parent=31 // pred_fallthru
          _
      $region32: #{tpu_custom_call.1} parent=5 // pred_fallthru
        _
      %p281 = scmp.le.s32.totalorder 1, %s22
      %p282 = scmp.lt.s32.totalorder %s22, 3
      %p283 = pnand %p281, %p282
      %p284 = pneg %p283
      // Predicated region
      $region41: #{tpu_custom_call.1} parent=5 // pred_check
        _
      $region42: #{tpu_custom_call.1} parent=5 // pred_check_branch
        %286 = sbr.rel (%p283) target = $region44
      $region43: #{tpu_custom_call.1} parent=5 // pred_region
        %s287 = ssub.s32 %s22, 1
        %s288 = sand.u32 %s35, 1
        %s289 = scalar_lea.sflag [#allocation3], %s288
        %s290 = sand.u32 %s35, 1
        %s291 = smul.addr %s290, 4
        %s292 = scalar_lea.vmem [#allocation2], %s291
        // Predicated region
        $region45: #{tpu_custom_call.1} parent=43 // pred_check
          %p293 = pneg %p48
        $region46: #{tpu_custom_call.1} parent=43 // pred_check_branch
          %295 = sbr.rel (%p293) target = $region48
        $region47: #{tpu_custom_call.1} parent=43 // pred_region
          %296 = dma.done %s289, 64
        $region48: #{tpu_custom_call.1} parent=43 // pred_fallthru
          _
        %s297 = sand.u32 %s27, 1
        %s298 = scalar_lea.sflag [#allocation6], %s297
        %s299 = sand.u32 %s61, 1
        %s300 = smul.addr %s299, 4
        %s301 = scalar_lea.vmem [#allocation5], %s300
        // Predicated region
        $region49: #{tpu_custom_call.1} parent=43 // pred_check
          %p302 = pneg %p74
        $region50: #{tpu_custom_call.1} parent=43 // pred_check_branch
          %304 = sbr.rel (%p302) target = $region52
        $region51: #{tpu_custom_call.1} parent=43 // pred_region
          %305 = dma.done %s298, 64
        $region52: #{tpu_custom_call.1} parent=43 // pred_fallthru
          _
        // Predicated region
        $region53: #{tpu_custom_call.1} parent=43 // pred_check
          %p306 = pneg %p95
        $region54: #{tpu_custom_call.1} parent=43 // pred_check_branch
          %308 = sbr.rel (%p306) target = $region56
        $region55: #{tpu_custom_call.1} parent=43 // pred_region
          %309 = dma.done [#allocation6], 256
        $region56: #{tpu_custom_call.1} parent=43 // pred_fallthru
          _
        // Predicated region
        $region57: #{tpu_custom_call.1} parent=43 // pred_check
          %p310 = pneg %p116
        $region58: #{tpu_custom_call.1} parent=43 // pred_check_branch
          %312 = sbr.rel (%p310) target = $region60
        $region59: #{tpu_custom_call.1} parent=43 // pred_region
          %313 = dma.done [#allocation9], 256
        $region60: #{tpu_custom_call.1} parent=43 // pred_fallthru
          _
        // Predicated region
        $region61: #{tpu_custom_call.1} parent=43 // pred_check
          %p314 = pneg %p137
        $region62: #{tpu_custom_call.1} parent=43 // pred_check_branch
          %316 = sbr.rel (%p314) target = $region64
        $region63: #{tpu_custom_call.1} parent=43 // pred_region
          %317 = dma.done [#allocation9], 256
        $region64: #{tpu_custom_call.1} parent=43 // pred_fallthru
          _
        %s318 = sand.u32 %s35, 1
        %s319 = scalar_lea.sflag [#allocation3], %s318
        %s320 = sand.u32 %s35, 1
        %s321 = smul.addr %s320, 4
        %s322 = scalar_lea.vmem [#allocation2], %s321
        %p323 = pneg %p48
        %p324 = pneg %p45
        %s325 = sand.u32 %s27, 1
        %s326 = scalar_lea.sflag [#allocation6], %s325
        %s327 = sand.u32 %s61, 1
        %s328 = smul.addr %s327, 4
        %s329 = scalar_lea.vmem [#allocation5], %s328
        %p330 = pneg %p74
        %p331 = pneg %p71
        %p332 = pneg %p95
        %p333 = pneg %p92
        %p334 = pneg %p116
        %p335 = pneg %p113
        %p336 = pneg %p137
        %p337 = pneg %p134
        %p338 = pneg %p158
        %p339 = pneg %p155
        %p340 = pneg %p184
        %p341 = pneg %p181
        %s342 = sand.u32 %s171, 1
        %s343 = scalar_lea.sflag [#allocation4], %s342
        %s344 = sand.u32 %s171, 1
        %s345 = smul.addr %s344, 4
        %s346 = scalar_lea.vmem [#allocation11], %s345
        %v348 = vld [vmem:[%s292] sm:$0xf]
        %v349 = vld [vmem:[%s301] sm:$0xf]
        %v350 = vld [vmem:[#allocation7] sm:$0xf]
        %v351 = vld [vmem:[#allocation7 + $0x4] sm:$0xf]
        %v352 = vld [vmem:[#allocation7 + $0x8] sm:$0xf]
        %v353 = vld [vmem:[#allocation7 + $0xc] sm:$0xf]
        %v354 = vld [vmem:[#allocation8] sm:$0xf]
        %v355 = vld [vmem:[#allocation8 + $0x4] sm:$0xf]
        %v356 = vld [vmem:[#allocation8 + $0x8] sm:$0xf]
        %v357 = vld [vmem:[#allocation8 + $0xc] sm:$0xf]
        %v362 = vunpack.c.l.b16 %v350
        %v363 = vunpack.c.l.b16 %v351
        %v364 = vunpack.c.l.b16 %v352
        %v365 = vunpack.c.l.b16 %v353
        %v366 = vpack.c.b16 %v363, %v362
        %v367 = vpack.c.b16 %v365, %v364
        %vm370 = vcmask 261120
        %v372 = vsel %vm370, %v348, 0
        %374 = vmatprep.subr.bf16.mxu0 0
        %375 = vmatpush1.bf16.msra.mxu0 %v366
        %376 = vmatprep.subr.bf16.mxu0 0
        %377 = vmatpush1.bf16.msra.mxu0 %v367
        %378 = vmatprep.subr.bf16.mxu0 0
        %379 = vmatpush1.bf16.msra.mxu0 0
        %380 = vmatprep.subr.bf16.mxu0 0
        %381 = vmatpush1.bf16.msra.mxu0 0
        %382 = vmatprep.subr.bf16.mxu0 0
        %383 = vmatpush1.bf16.msra.mxu0 0
        %384 = vmatprep.subr.bf16.mxu0 0
        %385 = vmatpush1.bf16.msra.mxu0 0
        %386 = vmatprep.subr.bf16.mxu0 0
        %387 = vmatpush1.bf16.msra.mxu0 0
        %388 = vmatprep.subr.bf16.mxu0 0
        %389 = vmatpush1.bf16.msra.mxu0 0
        %390 = vmatprep.subr.bf16.mxu0 0
        %391 = vmatpush1.bf16.msra.mxu0 0
        %392 = vmatprep.subr.bf16.mxu0 0
        %393 = vmatpush1.bf16.msra.mxu0 0
        %394 = vmatprep.subr.bf16.mxu0 0
        %395 = vmatpush1.bf16.msra.mxu0 0
        %396 = vmatprep.subr.bf16.mxu0 0
        %397 = vmatpush1.bf16.msra.mxu0 0
        %398 = vmatprep.subr.bf16.mxu0 0
        %399 = vmatpush1.bf16.msra.mxu0 0
        %400 = vmatprep.subr.bf16.mxu0 0
        %401 = vmatpush1.bf16.msra.mxu0 0
        %402 = vmatprep.subr.bf16.mxu0 0
        %403 = vmatpush1.bf16.msra.mxu0 0
        %404 = vmatprep.subr.bf16.mxu0 0
        %405 = vmatpush1.bf16.msra.mxu0 0
        %406 = vmatprep.mubr.bf16.mxu0 0
        %407 = vmatmul.mubr.bf16.gmra.mrb[0].mxu0 %v372
        %v408 = vpop.f32.mrb[0].mxu0
        %v409 = vadd.f32 0.0, %v408
        %v410 = vpop.f32.mrb[0].mxu0
        %v411 = vpop.f32.mrb[0].mxu0
        %v412 = vpop.f32.mrb[0].mxu0
        %413 = vdwg.mxu0
        %v414 = vpack.c.bf16 %v409, %v409
        %vm415 = vcmask 64512
        %v417 = vsel %vm415, %v349, 0
        %vm419 = vcmask 1043456
        %v421 = vsel %vm419, %v414, 0
        %423 = vmatprep.subr.bf16.mxu0 0
        %424 = vmatpush1.bf16.msra.mxu0 %v421
        %425 = vmatprep.subr.bf16.mxu0 0
        %426 = vmatpush1.bf16.msra.mxu0 0
        %427 = vmatprep.subr.bf16.mxu0 0
        %428 = vmatpush1.bf16.msra.mxu0 0
        %429 = vmatprep.subr.bf16.mxu0 0
        %430 = vmatpush1.bf16.msra.mxu0 0
        %431 = vmatprep.subr.bf16.mxu0 0
        %432 = vmatpush1.bf16.msra.mxu0 0
        %433 = vmatprep.subr.bf16.mxu0 0
        %434 = vmatpush1.bf16.msra.mxu0 0
        %435 = vmatprep.subr.bf16.mxu0 0
        %436 = vmatpush1.bf16.msra.mxu0 0
        %437 = vmatprep.subr.bf16.mxu0 0
        %438 = vmatpush1.bf16.msra.mxu0 0
        %439 = vmatprep.subr.bf16.mxu0 0
        %440 = vmatpush1.bf16.msra.mxu0 0
        %441 = vmatprep.subr.bf16.mxu0 0
        %442 = vmatpush1.bf16.msra.mxu0 0
        %443 = vmatprep.subr.bf16.mxu0 0
        %444 = vmatpush1.bf16.msra.mxu0 0
        %445 = vmatprep.subr.bf16.mxu0 0
        %446 = vmatpush1.bf16.msra.mxu0 0
        %447 = vmatprep.subr.bf16.mxu0 0
        %448 = vmatpush1.bf16.msra.mxu0 0
        %449 = vmatprep.subr.bf16.mxu0 0
        %450 = vmatpush1.bf16.msra.mxu0 0
        %451 = vmatprep.subr.bf16.mxu0 0
        %452 = vmatpush1.bf16.msra.mxu0 0
        %453 = vmatprep.subr.bf16.mxu0 0
        %454 = vmatpush1.bf16.msra.mxu0 0
        %455 = vmatprep.mubr.bf16.mxu0 0
        %456 = vmatmul.mubr.bf16.gmra.mrb[0].mxu0 %v417
        %v457 = vpop.f32.mrb[0].mxu0
        %v458 = vadd.f32 0.0, %v457
        %v459 = vpop.f32.mrb[0].mxu0
        %v460 = vpop.f32.mrb[0].mxu0
        %v461 = vpop.f32.mrb[0].mxu0
        %462 = vdwg.mxu0
        %v463 = vmax.f32 %v458, 0.0
        %v464 = vpack.c.bf16 %v463, %v463
        %v469 = vunpack.c.l.b16 %v354
        %v470 = vunpack.c.l.b16 %v355
        %v471 = vunpack.c.l.b16 %v356
        %v472 = vunpack.c.l.b16 %v357
        %v473 = vpack.c.b16 %v470, %v469
        %v474 = vpack.c.b16 %v472, %v471
        %v478 = vsel %vm370, %v464, 0
        %480 = vmatprep.subr.bf16.mxu0 0
        %481 = vmatpush1.bf16.msra.mxu0 %v473
        %482 = vmatprep.subr.bf16.mxu0 0
        %483 = vmatpush1.bf16.msra.mxu0 %v474
        %484 = vmatprep.subr.bf16.mxu0 0
        %485 = vmatpush1.bf16.msra.mxu0 0
        %486 = vmatprep.subr.bf16.mxu0 0
        %487 = vmatpush1.bf16.msra.mxu0 0
        %488 = vmatprep.subr.bf16.mxu0 0
        %489 = vmatpush1.bf16.msra.mxu0 0
        %490 = vmatprep.subr.bf16.mxu0 0
        %491 = vmatpush1.bf16.msra.mxu0 0
        %492 = vmatprep.subr.bf16.mxu0 0
        %493 = vmatpush1.bf16.msra.mxu0 0
        %494 = vmatprep.subr.bf16.mxu0 0
        %495 = vmatpush1.bf16.msra.mxu0 0
        %496 = vmatprep.subr.bf16.mxu0 0
        %497 = vmatpush1.bf16.msra.mxu0 0
        %498 = vmatprep.subr.bf16.mxu0 0
        %499 = vmatpush1.bf16.msra.mxu0 0
        %500 = vmatprep.subr.bf16.mxu0 0
        %501 = vmatpush1.bf16.msra.mxu0 0
        %502 = vmatprep.subr.bf16.mxu0 0
        %503 = vmatpush1.bf16.msra.mxu0 0
        %504 = vmatprep.subr.bf16.mxu0 0
        %505 = vmatpush1.bf16.msra.mxu0 0
        %506 = vmatprep.subr.bf16.mxu0 0
        %507 = vmatpush1.bf16.msra.mxu0 0
        %508 = vmatprep.subr.bf16.mxu0 0
        %509 = vmatpush1.bf16.msra.mxu0 0
        %510 = vmatprep.subr.bf16.mxu0 0
        %511 = vmatpush1.bf16.msra.mxu0 0
        %512 = vmatprep.mubr.bf16.mxu0 0
        %513 = vmatmul.mubr.bf16.gmra.mrb[0].mxu0 %v478
        %v514 = vpop.f32.mrb[0].mxu0
        %v515 = vadd.f32 0.0, %v514
        %v516 = vpop.f32.mrb[0].mxu0
        %v517 = vpop.f32.mrb[0].mxu0
        %v518 = vpop.f32.mrb[0].mxu0
        %519 = vdwg.mxu0
        %v520 = vpack.c.bf16 %v515, %v515
        %v522 = vsel %vm419, %v520, 0
        %524 = vmatprep.subr.bf16.mxu0 0
        %525 = vmatpush1.bf16.msra.mxu0 %v522
        %526 = vmatprep.subr.bf16.mxu0 0
        %527 = vmatpush1.bf16.msra.mxu0 0
        %528 = vmatprep.subr.bf16.mxu0 0
        %529 = vmatpush1.bf16.msra.mxu0 0
        %530 = vmatprep.subr.bf16.mxu0 0
        %531 = vmatpush1.bf16.msra.mxu0 0
        %532 = vmatprep.subr.bf16.mxu0 0
        %533 = vmatpush1.bf16.msra.mxu0 0
        %534 = vmatprep.subr.bf16.mxu0 0
        %535 = vmatpush1.bf16.msra.mxu0 0
        %536 = vmatprep.subr.bf16.mxu0 0
        %537 = vmatpush1.bf16.msra.mxu0 0
        %538 = vmatprep.subr.bf16.mxu0 0
        %539 = vmatpush1.bf16.msra.mxu0 0
        %540 = vmatprep.subr.bf16.mxu0 0
        %541 = vmatpush1.bf16.msra.mxu0 0
        %542 = vmatprep.subr.bf16.mxu0 0
        %543 = vmatpush1.bf16.msra.mxu0 0
        %544 = vmatprep.subr.bf16.mxu0 0
        %545 = vmatpush1.bf16.msra.mxu0 0
        %546 = vmatprep.subr.bf16.mxu0 0
        %547 = vmatpush1.bf16.msra.mxu0 0
        %548 = vmatprep.subr.bf16.mxu0 0
        %549 = vmatpush1.bf16.msra.mxu0 0
        %550 = vmatprep.subr.bf16.mxu0 0
        %551 = vmatpush1.bf16.msra.mxu0 0
        %552 = vmatprep.subr.bf16.mxu0 0
        %553 = vmatpush1.bf16.msra.mxu0 0
        %554 = vmatprep.subr.bf16.mxu0 0
        %555 = vmatpush1.bf16.msra.mxu0 0
        %556 = vmatprep.mubr.bf16.mxu0 0
        %557 = vmatmul.mubr.bf16.gmra.mrb[0].mxu0 %v417
        %v558 = vpop.f32.mrb[0].mxu0
        %v559 = vadd.f32 0.0, %v558
        %v560 = vpop.f32.mrb[0].mxu0
        %v561 = vpop.f32.mrb[0].mxu0
        %v562 = vpop.f32.mrb[0].mxu0
        %563 = vdwg.mxu0
        %v564 = vpack.c.bf16 %v559, %v559
        %v566 = vsel %vm370, %v564, 0
        %568 = vmatprep.subr.bf16.mxu0 0
        %569 = vmatpush1.bf16.xpose.msra.mxu0 %v566
        %570 = vmatprep.subr.bf16.mxu0 0
        %571 = vmatpush1.bf16.xpose.msra.mxu0 0
        %572 = vmatprep.subr.bf16.mxu0 0
        %573 = vmatpush1.bf16.xpose.msra.mxu0 0
        %574 = vmatprep.subr.bf16.mxu0 0
        %575 = vmatpush1.bf16.xpose.msra.mxu0 0
        %576 = vmatprep.subr.bf16.mxu0 0
        %577 = vmatpush1.bf16.xpose.msra.mxu0 0
        %578 = vmatprep.subr.bf16.mxu0 0
        %579 = vmatpush1.bf16.xpose.msra.mxu0 0
        %580 = vmatprep.subr.bf16.mxu0 0
        %581 = vmatpush1.bf16.xpose.msra.mxu0 0
        %582 = vmatprep.subr.bf16.mxu0 0
        %583 = vmatpush1.bf16.xpose.msra.mxu0 0
        %584 = vmatprep.subr.bf16.mxu0 0
        %585 = vmatpush1.bf16.xpose.msra.mxu0 0
        %586 = vmatprep.subr.bf16.mxu0 0
        %587 = vmatpush1.bf16.xpose.msra.mxu0 0
        %588 = vmatprep.subr.bf16.mxu0 0
        %589 = vmatpush1.bf16.xpose.msra.mxu0 0
        %590 = vmatprep.subr.bf16.mxu0 0
        %591 = vmatpush1.bf16.xpose.msra.mxu0 0
        %592 = vmatprep.subr.bf16.mxu0 0
        %593 = vmatpush1.bf16.xpose.msra.mxu0 0
        %594 = vmatprep.subr.bf16.mxu0 0
        %595 = vmatpush1.bf16.xpose.msra.mxu0 0
        %596 = vmatprep.subr.bf16.mxu0 0
        %597 = vmatpush1.bf16.xpose.msra.mxu0 0
        %598 = vmatprep.subr.bf16.mxu0 0
        %599 = vmatpush1.bf16.xpose.msra.mxu0 0
        %600 = vmatprep.mubr.bf16.mxu0 0
        %601 = vmatmul.mubr.bf16.gmra.mrb[0].mxu0 %v566
        %v602 = vpop.f32.mrb[0].mxu0
        %v603 = vadd.f32 0.0, %v602
        %v604 = vpop.f32.mrb[0].mxu0
        %v605 = vpop.f32.mrb[0].mxu0
        %v606 = vpop.f32.mrb[0].mxu0
        %607 = vdwg.mxu0
        %v608 = vxor.u32 %v603, 2147483648
        %v609 = vmul.f32 %v608, 1.442695
        %v610 = vpow.pop %v609
        %v611 = vadd.f32 %v610, 1.0
        %v612 = vrcp.pop %v611
        %v613 = vmul.f32 1.0, %v612
        %v614 = vpack.c.bf16 %v613, %v613
        %v615 = vld [vmem:[#allocation10] sm:$0xf]
        %v616 = vld [vmem:[#allocation10 + $0x4] sm:$0xf]
        %v617 = vld [vmem:[#allocation10 + $0x8] sm:$0xf]
        %v618 = vld [vmem:[#allocation10 + $0xc] sm:$0xf]
        %v623 = vunpack.c.l.b16 %v615
        %v624 = vunpack.c.l.b16 %v616
        %v625 = vunpack.c.l.b16 %v617
        %v626 = vunpack.c.l.b16 %v618
        %v627 = vpack.c.b16 %v624, %v623
        %v628 = vpack.c.b16 %v626, %v625
        %631 = vmatprep.subr.bf16.mxu0 0
        %632 = vmatpush1.bf16.msra.mxu0 %v627
        %633 = vmatprep.subr.bf16.mxu0 0
        %634 = vmatpush1.bf16.msra.mxu0 %v628
        %635 = vmatprep.subr.bf16.mxu0 0
        %636 = vmatpush1.bf16.msra.mxu0 0
        %637 = vmatprep.subr.bf16.mxu0 0
        %638 = vmatpush1.bf16.msra.mxu0 0
        %639 = vmatprep.subr.bf16.mxu0 0
        %640 = vmatpush1.bf16.msra.mxu0 0
        %641 = vmatprep.subr.bf16.mxu0 0
        %642 = vmatpush1.bf16.msra.mxu0 0
        %643 = vmatprep.subr.bf16.mxu0 0
        %644 = vmatpush1.bf16.msra.mxu0 0
        %645 = vmatprep.subr.bf16.mxu0 0
        %646 = vmatpush1.bf16.msra.mxu0 0
        %647 = vmatprep.subr.bf16.mxu0 0
        %648 = vmatpush1.bf16.msra.mxu0 0
        %649 = vmatprep.subr.bf16.mxu0 0
        %650 = vmatpush1.bf16.msra.mxu0 0
        %651 = vmatprep.subr.bf16.mxu0 0
        %652 = vmatpush1.bf16.msra.mxu0 0
        %653 = vmatprep.subr.bf16.mxu0 0
        %654 = vmatpush1.bf16.msra.mxu0 0
        %655 = vmatprep.subr.bf16.mxu0 0
        %656 = vmatpush1.bf16.msra.mxu0 0
        %657 = vmatprep.subr.bf16.mxu0 0
        %658 = vmatpush1.bf16.msra.mxu0 0
        %659 = vmatprep.subr.bf16.mxu0 0
        %660 = vmatpush1.bf16.msra.mxu0 0
        %661 = vmatprep.subr.bf16.mxu0 0
        %662 = vmatpush1.bf16.msra.mxu0 0
        %663 = vmatprep.mubr.bf16.mxu0 0
        %664 = vmatmul.mubr.bf16.gmra.mrb[0].mxu0 %v372
        %v665 = vpop.f32.mrb[0].mxu0
        %v666 = vadd.f32 0.0, %v665
        %v667 = vpop.f32.mrb[0].mxu0
        %v668 = vpop.f32.mrb[0].mxu0
        %v669 = vpop.f32.mrb[0].mxu0
        %670 = vdwg.mxu0
        %v671 = vpack.c.bf16 %v666, %v666
        %v672 = vld [vmem:[%s5] sm:$0x1]
        %v674 = vlaneseq
        %v675 = vshrl.u32 %v674, 7
        %v676 = vsub.s32 0, %v675
        %v677 = vrot.slane %v672, %v676
        %v680 = vsel %vm415, %v614, 0
        %v683 = vsel %vm419, %v671, 0
        %685 = vmatprep.subr.bf16.mxu0 0
        %686 = vmatpush1.bf16.msra.mxu0 %v683
        %687 = vmatprep.subr.bf16.mxu0 0
        %688 = vmatpush1.bf16.msra.mxu0 0
        %689 = vmatprep.subr.bf16.mxu0 0
        %690 = vmatpush1.bf16.msra.mxu0 0
        %691 = vmatprep.subr.bf16.mxu0 0
        %692 = vmatpush1.bf16.msra.mxu0 0
        %693 = vmatprep.subr.bf16.mxu0 0
        %694 = vmatpush1.bf16.msra.mxu0 0
        %695 = vmatprep.subr.bf16.mxu0 0
        %696 = vmatpush1.bf16.msra.mxu0 0
        %697 = vmatprep.subr.bf16.mxu0 0
        %698 = vmatpush1.bf16.msra.mxu0 0
        %699 = vmatprep.subr.bf16.mxu0 0
        %700 = vmatpush1.bf16.msra.mxu0 0
        %701 = vmatprep.subr.bf16.mxu0 0
        %702 = vmatpush1.bf16.msra.mxu0 0
        %703 = vmatprep.subr.bf16.mxu0 0
        %704 = vmatpush1.bf16.msra.mxu0 0
        %705 = vmatprep.subr.bf16.mxu0 0
        %706 = vmatpush1.bf16.msra.mxu0 0
        %707 = vmatprep.subr.bf16.mxu0 0
        %708 = vmatpush1.bf16.msra.mxu0 0
        %709 = vmatprep.subr.bf16.mxu0 0
        %710 = vmatpush1.bf16.msra.mxu0 0
        %711 = vmatprep.subr.bf16.mxu0 0
        %712 = vmatpush1.bf16.msra.mxu0 0
        %713 = vmatprep.subr.bf16.mxu0 0
        %714 = vmatpush1.bf16.msra.mxu0 0
        %715 = vmatprep.subr.bf16.mxu0 0
        %716 = vmatpush1.bf16.msra.mxu0 0
        %717 = vmatprep.mubr.bf16.mxu0 0
        %718 = vmatmul.mubr.bf16.gmra.mrb[0].mxu0 %v680
        %v719 = vpop.f32.mrb[0].mxu0
        %v720 = vadd.f32 %v677, %v719
        %v721 = vpop.f32.mrb[0].mxu0
        %v722 = vpop.f32.mrb[0].mxu0
        %v723 = vpop.f32.mrb[0].mxu0
        %724 = vdwg.mxu0
        %v725 = vpack.c.bf16 %v720, %v720
        %vm726 = vcmask 257024
        %727 = vst.msk [vmem:[%s346] sm:$0xf] %vm726, %v725
        %s728 = sand.u32 %s171, 1
        %s729 = scalar_lea.sflag [#allocation4], %s728
        %s730 = sand.u32 %s171, 1
        %s731 = smul.addr %s730, 4
        %s732 = scalar_lea.vmem [#allocation11], %s731
        // Predicated region
        $region65: #{tpu_custom_call.1} parent=43 // pred_check
          %p733 = pneg %p181
        $region66: #{tpu_custom_call.1} parent=43 // pred_check_branch
          %735 = sbr.rel (%p733) target = $region68
        $region67: #{tpu_custom_call.1} parent=43 // pred_region
          %s737 = ssub.s32 64, 64
          %738 = vsyncadd %s729, %s737
          %s739 = smul.addr %s27, 64
          %s740 = scalar_lea.hbm %s6, %s739
          %s742 = sshll.u32 %s732, 4
          %s743 = int_to_ptr.vmem [resolvable:$true] %s742
          %745 = dma.vmem_to_hbm [thread:$0]  %s743, 64, %s740, %s729
        $region68: #{tpu_custom_call.1} parent=43 // pred_fallthru
          _
      $region44: #{tpu_custom_call.1} parent=5 // pred_fallthru
        _
      %p746 = scmp.le.s32.totalorder 2, %s22
      // Predicated region
      $region69: #{tpu_custom_call.1} parent=5 // pred_check
        %p747 = pneg %p746
      $region70: #{tpu_custom_call.1} parent=5 // pred_check_branch
        %749 = sbr.rel (%p747) target = $region72
      $region71: #{tpu_custom_call.1} parent=5 // pred_region
        %s750 = ssub.s32 %s22, 2
        // Predicated region
        $region73: #{tpu_custom_call.1} parent=71 // pred_check
          %p751 = pneg %p187
        $region74: #{tpu_custom_call.1} parent=71 // pred_check_branch
          %753 = sbr.rel (%p751) target = $region76
        $region75: #{tpu_custom_call.1} parent=71 // pred_region
          %s754 = sand.u32 %s172, 1
          %s755 = scalar_lea.sflag [#allocation4], %s754
          %s756 = sand.u32 %s172, 1
          %s757 = smul.addr %s756, 4
          %s758 = scalar_lea.vmem [#allocation11], %s757
          %759 = dma.done %s755, 64
        $region76: #{tpu_custom_call.1} parent=71 // pred_fallthru
          _
      $region72: #{tpu_custom_call.1} parent=5 // pred_fallthru
        _
    $region6: #{tpu_custom_call.1} parent=1 // loop_footer
      %s26 = sadd.s32 1, %s22
    $region7: #{tpu_custom_call.1} parent=1 // loop_footer_branch
      %21 = sbr.rel target = $region3
    $region8: #{tpu_custom_call.1} parent=1 // loop_exit
      _
    %760 = vsyncpa [#allocation3], 1
    %s761 = scalar_lea.sflag [#allocation3], 1
    %762 = vsyncpa %s761, 1
    %763 = vsyncpa [#allocation6], 1
    %s764 = scalar_lea.sflag [#allocation6], 1
    %765 = vsyncpa %s764, 1
    %766 = vsyncpa [#allocation9], 1
    %767 = vsyncpa [#allocation4], 1
    %s768 = scalar_lea.sflag [#allocation4], 1
    %769 = vsyncpa %s768, 1

</llo_original>
